<compile_context>
chip_gen: v5e
topology: v5e:2x2
jax: 0.10.0
libtpu: 0.0.40
codegen_flags: <defaults>
</compile_context>

<pallas_src>
import jax
import jax.numpy as jnp
from jax.experimental import pallas as pl
from jax.experimental.pallas import tpu as pltpu


_TWO_PI = 6.283185307179586
# Cephes single-precision minimax coefficients on [-pi/4, pi/4].
_SIN_C0 = -1.9515295891e-4
_SIN_C1 = 8.3321608736e-3
_SIN_C2 = -1.6666654611e-1
_COS_C0 = 2.443315711809948e-5
_COS_C1 = -1.388731625493765e-3
_COS_C2 = 4.166664568298827e-2


def _fourier_kernel(x_ref, b_ref, out_ref):
    # x_ref:   (TN, C)        tile of points
    # b_ref:   (C, M_pad)     full (lane-padded, UNscaled) projection matrix
    # out_ref: (TN, 2*M_pad)  [sin | cos]
    m = b_ref.shape[1]

    # MXU projection (K = num_input_channels, zero-padded pass; idle vex slot).
    t = jnp.dot(x_ref[...], b_ref[...], preferred_element_type=jnp.float32)

    # --- shared range reduction ------------------------------------------
    # sin/cos(2*pi*t) has period exactly 1 in t, so u = t - round(t) is an
    # exact (Sterbenz) reduction to [-0.5, 0.5].
    u = t - jnp.round(t)
    q = jnp.round(4.0 * u)                 # quadrant index in {-2,-1,0,1,2}
    phi = _TWO_PI * (u - 0.25 * q)         # residual angle in [-pi/4, pi/4]
    z = phi * phi

    # Short polynomials evaluated once, shared by sin and cos.
    s = phi * (1.0 + z * (_SIN_C2 + z * (_SIN_C1 + z * _SIN_C0)))
    c = 1.0 + z * (-0.5 + z * (_COS_C2 + z * (_COS_C1 + z * _COS_C0)))

    # --- quadrant reconstruction (k = q mod 4) ----------------------------
    k = (q.astype(jnp.int32) + 4) & 3      # q >= -2, so (q+4) & 3 == q mod 4
    swap = (k == 1) | (k == 3)
    sin_v = jnp.where(swap, c, s)
    cos_v = jnp.where(swap, s, c)
    sin_v = jnp.where((k == 2) | (k == 3), -sin_v, sin_v)
    cos_v = jnp.where((k == 1) | (k == 2), -cos_v, cos_v)

    out_ref[:, :m] = sin_v.astype(out_ref.dtype)
    out_ref[:, m:] = cos_v.astype(out_ref.dtype)


def _round_up(v, mult):
    return -(-v // mult) * mult


def _detect_num_cores():
    """Number of TensorCores sharing one pallas_call (megacore / v7x)."""
    try:
        n = int(getattr(jax.devices()[0], "num_cores", 2))
        return n if n > 0 else 2
    except Exception:
        return 2


def _choose_tile_n(n_points, m_pad, c, out_itemsize, *,
                   vmem_budget_bytes=24 * 1024 * 1024, max_tile=2048,
                   num_cores=None):
    """Largest point-tile fitting the VMEM budget, multiple of 8; when the
    chip has >1 core, keep >= num_cores grid tiles for the parallel axis."""
    if num_cores is None:
        num_cores = _detect_num_cores()
    # Per point-row VMEM bytes:
    #  - double-buffered output:            2 * (2*m_pad) * out_itemsize
    #  - f32 body temporaries (~6 live):    6 * m_pad * 4
    #  - double-buffered x tile, lane-padded to 128 lanes: 2 * max(c,128) * 4
    per_row = 2 * (2 * m_pad) * out_itemsize + 6 * m_pad * 4 + 2 * max(c, 128) * 4
    cap = max(8, (vmem_budget_bytes // per_row) // 8 * 8)
    tile = min(max_tile, cap, _round_up(max(n_points, 8), 8))
    if num_cores > 1:
        per_core = _round_up(max(8, -(-n_points // num_cores)), 8)
        tile = min(tile, per_core)
    return max(8, tile)


def gaussian_fourier_feature_transform(x, B, *, out_dtype=jnp.bfloat16,
                                       tile_n=None):
    """x: [n_points, C], B: [C, M] -> [n_points, 2*M] = [sin(2*pi*x@B) | cos(...)].

    All math runs in float32; `out_dtype` controls only the stored result
    (bf16 default halves the dominant HBM writeback; pass jnp.float32 for
    full-precision output).
    """
    n_points, c = x.shape
    c_b, m = B.shape
    assert c == c_b, f"channel mismatch: {c} vs {c_b}"

    out_itemsize = jnp.dtype(out_dtype).itemsize

    # B stays UNscaled (the in-kernel period-1 reduction needs t = x@B).
    b_f32 = B.astype(jnp.float32)

    # Pad M to a multiple of 128 so both half-block stores stay lane-dense.
    m_pad = _round_up(m, 128)
    if m_pad != m:
        b_f32 = jnp.pad(b_f32, ((0, 0), (0, m_pad - m)))

    if tile_n is None:
        tile_n = _choose_tile_n(n_points, m_pad, c, out_itemsize)
    assert tile_n > 0 and tile_n % 8 == 0, "tile_n must be a positive multiple of 8"

    # Pad n_points up to a multiple of tile_n (glue, plain JAX).
    n_pad = (-n_points) % tile_n
    x_f32 = x.astype(jnp.float32)
    if n_pad:
        x_f32 = jnp.pad(x_f32, ((0, n_pad), (0, 0)))
    n_total = x_f32.shape[0]

    out = pl.pallas_call(
        _fourier_kernel,
        out_shape=jax.ShapeDtypeStruct((n_total, 2 * m_pad), out_dtype),
        grid_spec=pltpu.PrefetchScalarGridSpec(
            num_scalar_prefetch=0,
            grid=(n_total // tile_n,),
            in_specs=[
                pl.BlockSpec((tile_n, c), lambda i: (i, 0)),     # x tile
                pl.BlockSpec((c, m_pad), lambda i: (0, 0)),      # full B each step
            ],
            out_specs=pl.BlockSpec((tile_n, 2 * m_pad), lambda i: (i, 0)),
        ),
        compiler_params=pltpu.CompilerParams(
            dimension_semantics=("parallel",),
            vmem_limit_bytes=32 * 1024 * 1024,
        ),
        cost_estimate=pl.CostEstimate(
            flops=2 * n_total * c * m_pad + 32 * n_total * m_pad,
            transcendentals=2 * n_total * m_pad,
            bytes_accessed=(n_total * c * 4 + c * m_pad * 4
                            + n_total * 2 * m_pad * out_itemsize),
        ),
    )(x_f32, b_f32)

    out = out[:n_points]
    if m_pad != m:
        # Depad while preserving the [sin | cos] column layout.  This rewrites
        # the whole result in HBM; consumers that accept the padded layout can
        # skip it (no-op for the default mapping_size=256).
        out = jnp.concatenate([out[:, :m], out[:, m_pad:m_pad + m]], axis=1)
    return out


if __name__ == "__main__":
    num_input_channels = 3
    mapping_size = 256
    scale = 10.0
    n_points = 128

    key = jax.random.PRNGKey(0)
    kx, kb = jax.random.split(key)

    # Deterministic "parameter" B ~ N(0, 1) * scale (shape [C, M], as in __init__).
    B = jax.random.normal(kb, (num_input_channels, mapping_size), dtype=jnp.float32) * scale
    # Input points [n_points, C].
    x = jax.random.normal(kx, (n_points, num_input_channels), dtype=jnp.float32)

    # Pure-JAX reference.
    proj = 2.0 * jnp.pi * (x @ B)
    ref = jnp.concatenate([jnp.sin(proj), jnp.cos(proj)], axis=1)

    # Full-precision output path (tight check).
    out_f32 = gaussian_fourier_feature_transform(x, B, out_dtype=jnp.float32)
    out_f32 = jax.block_until_ready(out_f32)
    assert out_f32.shape == (n_points, 2 * mapping_size), out_f32.shape
    assert jnp.allclose(out_f32, ref, atol=5e-4, rtol=1e-4), "f32 mismatch vs reference"

    # Default bandwidth-optimized bf16 output path (looser check: bf16 keeps
    # ~2-3 significant digits, a deliberate documented trade-off).
    out_bf16 = gaussian_fourier_feature_transform(x, B)
    out_bf16 = jax.block_until_ready(out_bf16)
    assert out_bf16.dtype == jnp.bfloat16
    assert jnp.allclose(out_bf16.astype(jnp.float32), ref, atol=1.5e-2, rtol=0.0), \
        "bf16 mismatch vs reference"

    # Exercise the N/M padding + depad paths (M not a multiple of 128).
    m_small, n_small = 100, 40
    B2 = jax.random.normal(kb, (num_input_channels, m_small), dtype=jnp.float32) * scale
    x2 = x[:n_small]
    ref2_proj = 2.0 * jnp.pi * (x2 @ B2)
    ref2 = jnp.concatenate([jnp.sin(ref2_proj), jnp.cos(ref2_proj)], axis=1)
    out2 = gaussian_fourier_feature_transform(x2, B2, out_dtype=jnp.float32)
    out2 = jax.block_until_ready(out2)
    assert out2.shape == (n_small, 2 * m_small), out2.shape
    assert jnp.allclose(out2, ref2, atol=5e-4, rtol=1e-4), "padded-M mismatch vs reference"

    print("KERNEL_OK")
</pallas_src>

<mosaic_0001>
module attributes {stable_mosaic.version = 11 : i64} {
  func.func @_fourier_kernel(%arg0: i32, %arg1: memref<64x3xf32, #tpu.memory_space<vmem>>, %arg2: memref<3x256xf32, #tpu.memory_space<vmem>>, %arg3: memref<64x512xf32, #tpu.memory_space<vmem>>) attributes {dimension_semantics = [#tpu.dimension_semantics<parallel>], iteration_bounds = array<i64: 2>, scalar_prefetch = 0 : i64, scratch_operands = 0 : i64, tpu.core_type = #tpu.core_type<tc>, window_params = [{transform_indices = @transform_0, window_bounds = array<i64: 64, 3>}, {pipeline_mode = #tpu.pipeline_mode<synchronous>, transform_indices = @transform_1, window_bounds = array<i64: 3, 256>}, {transform_indices = @transform_2, window_bounds = array<i64: 64, 512>}]} {
    %c0 = arith.constant 0 : index
    %c0_0 = arith.constant 0 : index
    %0 = vector.load %arg1[%c0, %c0_0] : memref<64x3xf32, #tpu.memory_space<vmem>>, vector<64x3xf32>
    %c0_1 = arith.constant 0 : index
    %c0_2 = arith.constant 0 : index
    %1 = vector.load %arg2[%c0_1, %c0_2] : memref<3x256xf32, #tpu.memory_space<vmem>>, vector<3x256xf32>
    %cst = arith.constant dense<0.000000e+00> : vector<64x256xf32>
    %2 = tpu.matmul %0, %1, %cst {dimension_numbers = #tpu.dot_dimension_numbers<[1], [0], [0], [1], [0, 0, 1, 1], [], []>} : vector<64x3xf32>, vector<3x256xf32>, vector<64x256xf32> -> vector<64x256xf32>
    %3 = math.roundeven %2 : vector<64x256xf32>
    %4 = arith.subf %2, %3 : vector<64x256xf32>
    %cst_3 = arith.constant 4.000000e+00 : f32
    %5 = vector.broadcast %cst_3 : f32 to vector<64x256xf32>
    %6 = arith.mulf %5, %4 : vector<64x256xf32>
    %7 = math.roundeven %6 : vector<64x256xf32>
    %cst_4 = arith.constant 2.500000e-01 : f32
    %8 = vector.broadcast %cst_4 : f32 to vector<64x256xf32>
    %9 = arith.mulf %8, %7 : vector<64x256xf32>
    %10 = arith.subf %4, %9 : vector<64x256xf32>
    %cst_5 = arith.constant 6.28318548 : f32
    %11 = vector.broadcast %cst_5 : f32 to vector<64x256xf32>
    %12 = arith.mulf %11, %10 : vector<64x256xf32>
    %13 = arith.mulf %12, %12 : vector<64x256xf32>
    %cst_6 = arith.constant -1.95152956E-4 : f32
    %14 = vector.broadcast %cst_6 : f32 to vector<64x256xf32>
    %15 = arith.mulf %13, %14 : vector<64x256xf32>
    %cst_7 = arith.constant 0.00833216123 : f32
    %16 = vector.broadcast %cst_7 : f32 to vector<64x256xf32>
    %17 = arith.addf %16, %15 : vector<64x256xf32>
    %18 = arith.mulf %13, %17 : vector<64x256xf32>
    %cst_8 = arith.constant -0.166666552 : f32
    %19 = vector.broadcast %cst_8 : f32 to vector<64x256xf32>
    %20 = arith.addf %19, %18 : vector<64x256xf32>
    %21 = arith.mulf %13, %20 : vector<64x256xf32>
    %cst_9 = arith.constant 1.000000e+00 : f32
    %22 = vector.broadcast %cst_9 : f32 to vector<64x256xf32>
    %23 = arith.addf %22, %21 : vector<64x256xf32>
    %24 = arith.mulf %12, %23 : vector<64x256xf32>
    %cst_10 = arith.constant 2.44331568E-5 : f32
    %25 = vector.broadcast %cst_10 : f32 to vector<64x256xf32>
    %26 = arith.mulf %13, %25 : vector<64x256xf32>
    %cst_11 = arith.constant -0.00138873165 : f32
    %27 = vector.broadcast %cst_11 : f32 to vector<64x256xf32>
    %28 = arith.addf %27, %26 : vector<64x256xf32>
    %29 = arith.mulf %13, %28 : vector<64x256xf32>
    %cst_12 = arith.constant 0.0416666456 : f32
    %30 = vector.broadcast %cst_12 : f32 to vector<64x256xf32>
    %31 = arith.addf %30, %29 : vector<64x256xf32>
    %32 = arith.mulf %13, %31 : vector<64x256xf32>
    %cst_13 = arith.constant -5.000000e-01 : f32
    %33 = vector.broadcast %cst_13 : f32 to vector<64x256xf32>
    %34 = arith.addf %33, %32 : vector<64x256xf32>
    %35 = arith.mulf %13, %34 : vector<64x256xf32>
    %cst_14 = arith.constant 1.000000e+00 : f32
    %36 = vector.broadcast %cst_14 : f32 to vector<64x256xf32>
    %37 = arith.addf %36, %35 : vector<64x256xf32>
    %38 = arith.fptosi %7 : vector<64x256xf32> to vector<64x256xi32>
    %c4_i32 = arith.constant 4 : i32
    %39 = vector.broadcast %c4_i32 : i32 to vector<64x256xi32>
    %40 = arith.addi %38, %39 : vector<64x256xi32>
    %c3_i32 = arith.constant 3 : i32
    %41 = vector.broadcast %c3_i32 : i32 to vector<64x256xi32>
    %42 = arith.andi %40, %41 : vector<64x256xi32>
    %c1_i32 = arith.constant 1 : i32
    %43 = vector.broadcast %c1_i32 : i32 to vector<64x256xi32>
    %44 = arith.cmpi eq, %42, %43 : vector<64x256xi32>
    %c3_i32_15 = arith.constant 3 : i32
    %45 = vector.broadcast %c3_i32_15 : i32 to vector<64x256xi32>
    %46 = arith.cmpi eq, %42, %45 : vector<64x256xi32>
    %47 = arith.ori %44, %46 : vector<64x256xi1>
    %48 = arith.select %47, %37, %24 : vector<64x256xi1>, vector<64x256xf32>
    %49 = arith.select %47, %24, %37 : vector<64x256xi1>, vector<64x256xf32>
    %c2_i32 = arith.constant 2 : i32
    %50 = vector.broadcast %c2_i32 : i32 to vector<64x256xi32>
    %51 = arith.cmpi eq, %42, %50 : vector<64x256xi32>
    %c3_i32_16 = arith.constant 3 : i32
    %52 = vector.broadcast %c3_i32_16 : i32 to vector<64x256xi32>
    %53 = arith.cmpi eq, %42, %52 : vector<64x256xi32>
    %54 = arith.ori %51, %53 : vector<64x256xi1>
    %cst_17 = arith.constant 0.000000e+00 : f32
    %55 = vector.broadcast %cst_17 : f32 to vector<64x256xf32>
    %56 = arith.subf %55, %48 : vector<64x256xf32>
    %57 = arith.select %54, %56, %48 : vector<64x256xi1>, vector<64x256xf32>
    %c1_i32_18 = arith.constant 1 : i32
    %58 = vector.broadcast %c1_i32_18 : i32 to vector<64x256xi32>
    %59 = arith.cmpi eq, %42, %58 : vector<64x256xi32>
    %c2_i32_19 = arith.constant 2 : i32
    %60 = vector.broadcast %c2_i32_19 : i32 to vector<64x256xi32>
    %61 = arith.cmpi eq, %42, %60 : vector<64x256xi32>
    %62 = arith.ori %59, %61 : vector<64x256xi1>
    %cst_20 = arith.constant 0.000000e+00 : f32
    %63 = vector.broadcast %cst_20 : f32 to vector<64x256xf32>
    %64 = arith.subf %63, %49 : vector<64x256xf32>
    %65 = arith.select %62, %64, %49 : vector<64x256xi1>, vector<64x256xf32>
    %c0_21 = arith.constant 0 : index
    %c0_22 = arith.constant 0 : index
    %66 = vector.load %arg3[%c0_21, %c0_22] : memref<64x512xf32, #tpu.memory_space<vmem>>, vector<64x256xf32>
    tpu.vector_store %arg3[%c0_21, %c0_22], %57 {strides = array<i32>} : memref<64x512xf32, #tpu.memory_space<vmem>>, vector<64x256xf32>,
    %c0_23 = arith.constant 0 : index
    %c256 = arith.constant 256 : index
    %67 = vector.load %arg3[%c0_23, %c256] : memref<64x512xf32, #tpu.memory_space<vmem>>, vector<64x256xf32>
    tpu.vector_store %arg3[%c0_23, %c256], %65 {strides = array<i32>} : memref<64x512xf32, #tpu.memory_space<vmem>>, vector<64x256xf32>,
    return
  }
  func.func @transform_0(%arg0: i32) -> (i32, i32) {
    %c0_i32 = arith.constant 0 : i32
    %c0_i32_0 = arith.constant 0 : i32
    return %arg0, %c0_i32 : i32, i32
  }
  func.func @transform_1(%arg0: i32) -> (i32, i32) {
    %c0_i32 = arith.constant 0 : i32
    %c0_i32_0 = arith.constant 0 : i32
    %c0_i32_1 = arith.constant 0 : i32
    return %c0_i32, %c0_i32_0 : i32, i32
  }
  func.func @transform_2(%arg0: i32) -> (i32, i32) {
    %c0_i32 = arith.constant 0 : i32
    %c0_i32_0 = arith.constant 0 : i32
    return %arg0, %c0_i32 : i32, i32
  }
}

</mosaic_0001>

<llo_original>
// kernel: tpu_custom_call.1
$region0: #{tpu_custom_call.1}
  #allocation0 [shape = 'u32[]', space=smem, size = 0x4, offset = 0x4, fixed_abs, tag = 'smem constant byte address 0x4 - core index']
  #allocation1 [shape = 'u32[72,128]{1,0:T(1,128)}', space=vmem, size = 0x9000, scoped, tag = 'internal scratch']
  %s0 = inlined_call_operand.vmem [shape: f32[128,3], index: 0, kind: input, shape index: {}]
  %s1 = inlined_call_operand.vmem [shape: f32[3,256], index: 1, kind: input, shape index: {}]
  %s2 = inlined_call_operand.hbm [shape: f32[128,512], index: 2, kind: output, shape index: {}]
  %s3 = sld [smem:[#allocation0]]
  $region41: #{tpu_custom_call.1} parent=0
    _
  %s5 = ssub.s32 1, %s3
  %s6 = scalar_select 0, %s5, %s3
  $region1: #{tpu_custom_call.1} parent=0
    #allocation2 [shape = 'u8[262144]{0}', space=vmem, size = 0x40000, scoped, tag = 'output window, operand 0']
    #allocation3 [shape = 's32[2]{0}', space=sflag, size = 0x8, scoped, tag = 'scoped memory for tpu_custom_call.1']
    %7 = vsyncpa [#allocation3], 0
    %s8 = scalar_lea.sflag [#allocation3], 1
    %9 = vsyncpa %s8, 0
    loop: start=0, step=1, limit=4
    $region2: #{tpu_custom_call.1} parent=1 // loop_pre_header
      _
    $region3: #{tpu_custom_call.1} parent=1 // loop_header
      %s11 = sphi 0, %s15
      %p12 = scmp.ge.s32.totalorder %s11, 4
      %s21 = sphi 0, %s23
      %s24 = sphi 0, %s21
      %s25 = sphi 0, %s24
      %s41 = sphi 0, %s25
      %s45 = sphi 0, %s45
      %s47 = sphi 0, %s45
      %s48 = sphi 0, %s47
      %s62 = sphi 0, %s48
      %s68 = sphi 0, %s70
      %s71 = sphi 0, %s68
      %s72 = sphi 0, %s71
      %s88 = sphi 0, %s72
    $region4: #{tpu_custom_call.1} parent=1 // loop_header_branch
      %14 = sbr.rel (%p12) target = $region8
    $region5: #{tpu_custom_call.1} parent=1 // loop_body
      %s16 = ssub.s32 %s11, 1
      %s17 = ssub.s32 %s11, 2
      %s18 = sadd.s32 %s11, 1
      %s19 = ssub.s32 %s11, %s18
      %p20 = scmp.eq.s32.totalorder %s19, 0
      %s22 = sadd.s32 %s21, 1
      %s23 = scalar_select %p20, %s21, %s22
      %p26 = pneg %p20
      %p27 = scmp.eq.s32.totalorder %s11, 1
      %p28 = por %p26, %p27
      %p29 = scmp.ne.s32.totalorder %s21, %s24
      %p30 = scmp.eq.s32.totalorder %s11, 0
      %p31 = por %p29, %p30
      %p32 = scmp.ne.s32.totalorder %s21, %s24
      %p33 = scmp.eq.s32.totalorder %s16, 1
      %p34 = por %p32, %p33
      %p35 = scmp.ne.s32.totalorder %s24, %s25
      %p36 = scmp.eq.s32.totalorder %s16, 0
      %p37 = por %p35, %p36
      %p38 = scmp.ne.s32.totalorder %s24, %s25
      %p39 = scmp.eq.s32.totalorder %s17, 1
      %p40 = por %p38, %p39
      %p42 = scmp.ne.s32.totalorder %s25, %s41
      %p43 = scmp.eq.s32.totalorder %s17, 0
      %p44 = por %p42, %p43
      %s46 = sadd.s32 %s45, 1
      %p49 = scmp.eq.s32.totalorder %s11, 1
      %p50 = scmp.ne.s32.totalorder %s45, %s47
      %p51 = scmp.eq.s32.totalorder %s11, 0
      %p52 = por %p50, %p51
      %p53 = scmp.ne.s32.totalorder %s45, %s47
      %p54 = scmp.eq.s32.totalorder %s16, 1
      %p55 = por %p53, %p54
      %p56 = scmp.ne.s32.totalorder %s47, %s48
      %p57 = scmp.eq.s32.totalorder %s16, 0
      %p58 = por %p56, %p57
      %p59 = scmp.ne.s32.totalorder %s47, %s48
      %p60 = scmp.eq.s32.totalorder %s17, 1
      %p61 = por %p59, %p60
      %p63 = scmp.ne.s32.totalorder %s48, %s62
      %p64 = scmp.eq.s32.totalorder %s17, 0
      %p65 = por %p63, %p64
      %s66 = ssub.s32 %s11, %s18
      %p67 = scmp.eq.s32.totalorder %s66, 0
      %s69 = sadd.s32 %s68, 1
      %s70 = scalar_select %p67, %s68, %s69
      %p73 = pneg %p67
      %p74 = scmp.eq.s32.totalorder %s11, 1
      %p75 = por %p73, %p74
      %p76 = scmp.ne.s32.totalorder %s68, %s71
      %p77 = scmp.eq.s32.totalorder %s11, 0
      %p78 = por %p76, %p77
      %p79 = scmp.ne.s32.totalorder %s68, %s71
      %p80 = scmp.eq.s32.totalorder %s16, 1
      %p81 = por %p79, %p80
      %p82 = scmp.ne.s32.totalorder %s71, %s72
      %p83 = scmp.eq.s32.totalorder %s16, 0
      %p84 = por %p82, %p83
      %p85 = scmp.ne.s32.totalorder %s71, %s72
      %p86 = scmp.eq.s32.totalorder %s17, 1
      %p87 = por %p85, %p86
      %p89 = scmp.ne.s32.totalorder %s72, %s88
      %p90 = scmp.eq.s32.totalorder %s17, 0
      %p91 = por %p89, %p90
      %p92 = scmp.le.s32.totalorder 1, %s11
      %p93 = scmp.lt.s32.totalorder %s11, 3
      %p94 = pnand %p92, %p93
      %p95 = pneg %p94
      // Predicated region
      $region9: #{tpu_custom_call.1} parent=5 // pred_check
        _
      $region10: #{tpu_custom_call.1} parent=5 // pred_check_branch
        %97 = sbr.rel (%p94) target = $region12
      $region11: #{tpu_custom_call.1} parent=5 // pred_region
        %s98 = ssub.s32 %s11, 1
        // Predicated region
        $region13: #{tpu_custom_call.1} parent=11 // pred_check
          %p99 = pneg %p58
        $region14: #{tpu_custom_call.1} parent=11 // pred_check_branch
          %101 = sbr.rel (%p99) target = $region16
        $region15: #{tpu_custom_call.1} parent=11 // pred_region
          _
        $region16: #{tpu_custom_call.1} parent=11 // pred_fallthru
          _
      $region12: #{tpu_custom_call.1} parent=5 // pred_fallthru
        _
      %p102 = scmp.lt.s32.totalorder %s11, 2
      // Predicated region
      $region17: #{tpu_custom_call.1} parent=5 // pred_check
        %p103 = pneg %p102
      $region18: #{tpu_custom_call.1} parent=5 // pred_check_branch
        %105 = sbr.rel (%p103) target = $region20
      $region19: #{tpu_custom_call.1} parent=5 // pred_region
        // Predicated region
        $region21: #{tpu_custom_call.1} parent=19 // pred_check
          %p106 = pneg %p31
        $region22: #{tpu_custom_call.1} parent=19 // pred_check_branch
          %108 = sbr.rel (%p106) target = $region24
        $region23: #{tpu_custom_call.1} parent=19 // pred_region
          %s109 = smul.u32 8, %s11
          %p110 = scmp.lt.s32.totalorder %s109, 15
          %s111 = scalar_select %p110, %s109, 15
          %s112 = smul.addr %s111, 8
          %s113 = scalar_lea.vmem %s0, %s112
          %s114 = smul.u32 8, %s11
        $region24: #{tpu_custom_call.1} parent=19 // pred_fallthru
          _
      $region20: #{tpu_custom_call.1} parent=5 // pred_fallthru
        _
      %p115 = scmp.le.s32.totalorder 1, %s11
      %p116 = scmp.lt.s32.totalorder %s11, 3
      %p117 = pnand %p115, %p116
      %p118 = pneg %p117
      // Predicated region
      $region25: #{tpu_custom_call.1} parent=5 // pred_check
        _
      $region26: #{tpu_custom_call.1} parent=5 // pred_check_branch
        %120 = sbr.rel (%p117) target = $region28
      $region27: #{tpu_custom_call.1} parent=5 // pred_region
        %s121 = ssub.s32 %s11, 1
        %s122 = smul.u32 8, %s16
        %p123 = scmp.lt.s32.totalorder %s122, 15
        %s124 = scalar_select %p123, %s122, 15
        %s125 = smul.addr %s124, 8
        %s126 = scalar_lea.vmem %s0, %s125
        %p127 = pneg %p37
        %p128 = pneg %p34
        %p129 = pneg %p58
        %p130 = pneg %p55
        %p131 = pneg %p84
        %p132 = pneg %p81
        %s133 = sand.u32 %s71, 1
        %s134 = scalar_lea.sflag [#allocation3], %s133
        %s135 = sand.u32 %s71, 1
        %s136 = smul.addr %s135, 256
        %s137 = scalar_lea.vmem [#allocation2], %s136
        %s138 = smul.u32 8, %s16
        %p139 = scmp.lt.s32.totalorder %s138, 15
        %s140 = scalar_select %p139, %s138, 15
        %s141 = smul.addr %s140, 8
        %s142 = scalar_lea.vmem %s0, %s141
        %s143 = smul.u32 8, %s16
        %s144 = smul.u32 8, %s16
        %v145 = vld [vmem:[%s142] sm:$0xff]
        %v146 = vld [vmem:[%s142 + $0x8] sm:$0xff]
        %v147 = vld [vmem:[%s142 + $0x10] sm:$0xff]
        %v148 = vld [vmem:[%s142 + $0x18] sm:$0xff]
        %v149 = vld [vmem:[%s142 + $0x20] sm:$0xff]
        %v150 = vld [vmem:[%s142 + $0x28] sm:$0xff]
        %v151 = vld [vmem:[%s142 + $0x30] sm:$0xff]
        %v152 = vld [vmem:[%s142 + $0x38] sm:$0xff]
        %v153 = vld [vmem:[%s1] sm:$0x77]
        %155 = vst [vmem:[#allocation1] ss:$2 sm:$0xff] %v153
        %v156 = vld.sshfl [vmem:[#allocation1] sm:$0xff pattern:$0x75316420]
        %v157 = vld.sshfl [vmem:[#allocation1 + $0x8] sm:$0xff pattern:$0x75316420]
        %vm158 = vcmask 23552
        %v160 = vsel %vm158, %v145, 0
        %v163 = vsel %vm158, %v146, 0
        %v166 = vsel %vm158, %v147, 0
        %v169 = vsel %vm158, %v148, 0
        %v172 = vsel %vm158, %v149, 0
        %v175 = vsel %vm158, %v150, 0
        %v178 = vsel %vm158, %v151, 0
        %v181 = vsel %vm158, %v152, 0
        %vm183 = vcmask 1042432
        %v184 = vsel %vm183, %v156, 0
        %v186 = vsel %vm183, %v157, 0
        %188 = vmatpush.msra.mxu0 0.0
        %189 = vmatpush.msra.mxu0 0.0
        %190 = vmatpush.msra.mxu0 0.0
        %191 = vmatpush.msra.mxu0 0.0
        %192 = vmatpush.msra.mxu0 0.0
        %193 = vmatpush.msra.mxu0 0.0
        %194 = vmatpush.msra.mxu0 0.0
        %195 = vmatpush.msra.mxu0 0.0
        %196 = vmatpush.msra.mxu0 0.0
        %197 = vmatpush.msra.mxu0 0.0
        %198 = vmatpush.msra.mxu0 0.0
        %199 = vmatpush.msra.mxu0 0.0
        %200 = vmatpush.msra.mxu0 0.0
        %201 = vmatpush.msra.mxu0 0.0
        %202 = vmatpush.msra.mxu0 0.0
        %203 = vmatpush.msra.mxu0 %v184
        %204 = vmatmul.f32.gmra.mxu0 %v160
        %v205 = vpop.f32.mrf.mxu0
        %v206 = vadd.f32 0.0, %v205
        %207 = vmatmul.f32.gmra.mxu0 %v163
        %v208 = vpop.f32.mrf.mxu0
        %v209 = vadd.f32 0.0, %v208
        %210 = vmatmul.f32.gmra.mxu0 %v166
        %v211 = vpop.f32.mrf.mxu0
        %v212 = vadd.f32 0.0, %v211
        %213 = vmatmul.f32.gmra.mxu0 %v169
        %v214 = vpop.f32.mrf.mxu0
        %v215 = vadd.f32 0.0, %v214
        %216 = vmatmul.f32.gmra.mxu0 %v172
        %v217 = vpop.f32.mrf.mxu0
        %v218 = vadd.f32 0.0, %v217
        %219 = vmatmul.f32.gmra.mxu0 %v175
        %v220 = vpop.f32.mrf.mxu0
        %v221 = vadd.f32 0.0, %v220
        %222 = vmatmul.f32.gmra.mxu0 %v178
        %v223 = vpop.f32.mrf.mxu0
        %v224 = vadd.f32 0.0, %v223
        %225 = vmatmul.f32.gmra.mxu0 %v181
        %v226 = vpop.f32.mrf.mxu0
        %v227 = vadd.f32 0.0, %v226
        %228 = vdwg.mxu0
        %229 = vmatpush.msra.mxu0 0.0
        %230 = vmatpush.msra.mxu0 0.0
        %231 = vmatpush.msra.mxu0 0.0
        %232 = vmatpush.msra.mxu0 0.0
        %233 = vmatpush.msra.mxu0 0.0
        %234 = vmatpush.msra.mxu0 0.0
        %235 = vmatpush.msra.mxu0 0.0
        %236 = vmatpush.msra.mxu0 0.0
        %237 = vmatpush.msra.mxu0 0.0
        %238 = vmatpush.msra.mxu0 0.0
        %239 = vmatpush.msra.mxu0 0.0
        %240 = vmatpush.msra.mxu0 0.0
        %241 = vmatpush.msra.mxu0 0.0
        %242 = vmatpush.msra.mxu0 0.0
        %243 = vmatpush.msra.mxu0 0.0
        %244 = vmatpush.msra.mxu0 %v186
        %245 = vmatmul.f32.gmra.mxu0 %v160
        %v246 = vpop.f32.mrf.mxu0
        %v247 = vadd.f32 0.0, %v246
        %248 = vmatmul.f32.gmra.mxu0 %v163
        %v249 = vpop.f32.mrf.mxu0
        %v250 = vadd.f32 0.0, %v249
        %251 = vmatmul.f32.gmra.mxu0 %v166
        %v252 = vpop.f32.mrf.mxu0
        %v253 = vadd.f32 0.0, %v252
        %254 = vmatmul.f32.gmra.mxu0 %v169
        %v255 = vpop.f32.mrf.mxu0
        %v256 = vadd.f32 0.0, %v255
        %257 = vmatmul.f32.gmra.mxu0 %v172
        %v258 = vpop.f32.mrf.mxu0
        %v259 = vadd.f32 0.0, %v258
        %260 = vmatmul.f32.gmra.mxu0 %v175
        %v261 = vpop.f32.mrf.mxu0
        %v262 = vadd.f32 0.0, %v261
        %263 = vmatmul.f32.gmra.mxu0 %v178
        %v264 = vpop.f32.mrf.mxu0
        %v265 = vadd.f32 0.0, %v264
        %266 = vmatmul.f32.gmra.mxu0 %v181
        %v267 = vpop.f32.mrf.mxu0
        %v268 = vadd.f32 0.0, %v267
        %269 = vdwg.mxu0
        %v270 = vround.ne.pseudo %v206
        %v271 = vround.ne.pseudo %v247
        %v272 = vround.ne.pseudo %v209
        %v273 = vround.ne.pseudo %v250
        %v274 = vround.ne.pseudo %v212
        %v275 = vround.ne.pseudo %v253
        %v276 = vround.ne.pseudo %v215
        %v277 = vround.ne.pseudo %v256
        %v278 = vround.ne.pseudo %v218
        %v279 = vround.ne.pseudo %v259
        %v280 = vround.ne.pseudo %v221
        %v281 = vround.ne.pseudo %v262
        %v282 = vround.ne.pseudo %v224
        %v283 = vround.ne.pseudo %v265
        %v284 = vround.ne.pseudo %v227
        %v285 = vround.ne.pseudo %v268
        %v286 = vsub.f32 %v206, %v270
        %v287 = vsub.f32 %v247, %v271
        %v288 = vsub.f32 %v209, %v272
        %v289 = vsub.f32 %v250, %v273
        %v290 = vsub.f32 %v212, %v274
        %v291 = vsub.f32 %v253, %v275
        %v292 = vsub.f32 %v215, %v276
        %v293 = vsub.f32 %v256, %v277
        %v294 = vsub.f32 %v218, %v278
        %v295 = vsub.f32 %v259, %v279
        %v296 = vsub.f32 %v221, %v280
        %v297 = vsub.f32 %v262, %v281
        %v298 = vsub.f32 %v224, %v282
        %v299 = vsub.f32 %v265, %v283
        %v300 = vsub.f32 %v227, %v284
        %v301 = vsub.f32 %v268, %v285
        %v302 = vmul.f32 %v286, 4.0
        %v303 = vmul.f32 %v287, 4.0
        %v304 = vmul.f32 %v288, 4.0
        %v305 = vmul.f32 %v289, 4.0
        %v306 = vmul.f32 %v290, 4.0
        %v307 = vmul.f32 %v291, 4.0
        %v308 = vmul.f32 %v292, 4.0
        %v309 = vmul.f32 %v293, 4.0
        %v310 = vmul.f32 %v294, 4.0
        %v311 = vmul.f32 %v295, 4.0
        %v312 = vmul.f32 %v296, 4.0
        %v313 = vmul.f32 %v297, 4.0
        %v314 = vmul.f32 %v298, 4.0
        %v315 = vmul.f32 %v299, 4.0
        %v316 = vmul.f32 %v300, 4.0
        %v317 = vmul.f32 %v301, 4.0
        %v318 = vround.ne.pseudo %v302
        %v319 = vround.ne.pseudo %v303
        %v320 = vround.ne.pseudo %v304
        %v321 = vround.ne.pseudo %v305
        %v322 = vround.ne.pseudo %v306
        %v323 = vround.ne.pseudo %v307
        %v324 = vround.ne.pseudo %v308
        %v325 = vround.ne.pseudo %v309
        %v326 = vround.ne.pseudo %v310
        %v327 = vround.ne.pseudo %v311
        %v328 = vround.ne.pseudo %v312
        %v329 = vround.ne.pseudo %v313
        %v330 = vround.ne.pseudo %v314
        %v331 = vround.ne.pseudo %v315
        %v332 = vround.ne.pseudo %v316
        %v333 = vround.ne.pseudo %v317
        %v334 = vmul.f32 %v318, 0.25
        %v335 = vmul.f32 %v319, 0.25
        %v336 = vmul.f32 %v320, 0.25
        %v337 = vmul.f32 %v321, 0.25
        %v338 = vmul.f32 %v322, 0.25
        %v339 = vmul.f32 %v323, 0.25
        %v340 = vmul.f32 %v324, 0.25
        %v341 = vmul.f32 %v325, 0.25
        %v342 = vmul.f32 %v326, 0.25
        %v343 = vmul.f32 %v327, 0.25
        %v344 = vmul.f32 %v328, 0.25
        %v345 = vmul.f32 %v329, 0.25
        %v346 = vmul.f32 %v330, 0.25
        %v347 = vmul.f32 %v331, 0.25
        %v348 = vmul.f32 %v332, 0.25
        %v349 = vmul.f32 %v333, 0.25
        %v350 = vsub.f32 %v286, %v334
        %v351 = vsub.f32 %v287, %v335
        %v352 = vsub.f32 %v288, %v336
        %v353 = vsub.f32 %v289, %v337
        %v354 = vsub.f32 %v290, %v338
        %v355 = vsub.f32 %v291, %v339
        %v356 = vsub.f32 %v292, %v340
        %v357 = vsub.f32 %v293, %v341
        %v358 = vsub.f32 %v294, %v342
        %v359 = vsub.f32 %v295, %v343
        %v360 = vsub.f32 %v296, %v344
        %v361 = vsub.f32 %v297, %v345
        %v362 = vsub.f32 %v298, %v346
        %v363 = vsub.f32 %v299, %v347
        %v364 = vsub.f32 %v300, %v348
        %v365 = vsub.f32 %v301, %v349
        %v366 = vmul.f32 %v350, 6.2831855
        %v367 = vmul.f32 %v351, 6.2831855
        %v368 = vmul.f32 %v352, 6.2831855
        %v369 = vmul.f32 %v353, 6.2831855
        %v370 = vmul.f32 %v354, 6.2831855
        %v371 = vmul.f32 %v355, 6.2831855
        %v372 = vmul.f32 %v356, 6.2831855
        %v373 = vmul.f32 %v357, 6.2831855
        %v374 = vmul.f32 %v358, 6.2831855
        %v375 = vmul.f32 %v359, 6.2831855
        %v376 = vmul.f32 %v360, 6.2831855
        %v377 = vmul.f32 %v361, 6.2831855
        %v378 = vmul.f32 %v362, 6.2831855
        %v379 = vmul.f32 %v363, 6.2831855
        %v380 = vmul.f32 %v364, 6.2831855
        %v381 = vmul.f32 %v365, 6.2831855
        %v382 = vmul.f32 %v366, %v366
        %v383 = vmul.f32 %v367, %v367
        %v384 = vmul.f32 %v368, %v368
        %v385 = vmul.f32 %v369, %v369
        %v386 = vmul.f32 %v370, %v370
        %v387 = vmul.f32 %v371, %v371
        %v388 = vmul.f32 %v372, %v372
        %v389 = vmul.f32 %v373, %v373
        %v390 = vmul.f32 %v374, %v374
        %v391 = vmul.f32 %v375, %v375
        %v392 = vmul.f32 %v376, %v376
        %v393 = vmul.f32 %v377, %v377
        %v394 = vmul.f32 %v378, %v378
        %v395 = vmul.f32 %v379, %v379
        %v396 = vmul.f32 %v380, %v380
        %v397 = vmul.f32 %v381, %v381
        %v398 = vmul.f32 %v382, -0.00019515296
        %v399 = vmul.f32 %v383, -0.00019515296
        %v400 = vmul.f32 %v384, -0.00019515296
        %v401 = vmul.f32 %v385, -0.00019515296
        %v402 = vmul.f32 %v386, -0.00019515296
        %v403 = vmul.f32 %v387, -0.00019515296
        %v404 = vmul.f32 %v388, -0.00019515296
        %v405 = vmul.f32 %v389, -0.00019515296
        %v406 = vmul.f32 %v390, -0.00019515296
        %v407 = vmul.f32 %v391, -0.00019515296
        %v408 = vmul.f32 %v392, -0.00019515296
        %v409 = vmul.f32 %v393, -0.00019515296
        %v410 = vmul.f32 %v394, -0.00019515296
        %v411 = vmul.f32 %v395, -0.00019515296
        %v412 = vmul.f32 %v396, -0.00019515296
        %v413 = vmul.f32 %v397, -0.00019515296
        %v414 = vadd.f32 %v398, 0.008332161
        %v415 = vadd.f32 %v399, 0.008332161
        %v416 = vadd.f32 %v400, 0.008332161
        %v417 = vadd.f32 %v401, 0.008332161
        %v418 = vadd.f32 %v402, 0.008332161
        %v419 = vadd.f32 %v403, 0.008332161
        %v420 = vadd.f32 %v404, 0.008332161
        %v421 = vadd.f32 %v405, 0.008332161
        %v422 = vadd.f32 %v406, 0.008332161
        %v423 = vadd.f32 %v407, 0.008332161
        %v424 = vadd.f32 %v408, 0.008332161
        %v425 = vadd.f32 %v409, 0.008332161
        %v426 = vadd.f32 %v410, 0.008332161
        %v427 = vadd.f32 %v411, 0.008332161
        %v428 = vadd.f32 %v412, 0.008332161
        %v429 = vadd.f32 %v413, 0.008332161
        %v430 = vmul.f32 %v382, %v414
        %v431 = vmul.f32 %v383, %v415
        %v432 = vmul.f32 %v384, %v416
        %v433 = vmul.f32 %v385, %v417
        %v434 = vmul.f32 %v386, %v418
        %v435 = vmul.f32 %v387, %v419
        %v436 = vmul.f32 %v388, %v420
        %v437 = vmul.f32 %v389, %v421
        %v438 = vmul.f32 %v390, %v422
        %v439 = vmul.f32 %v391, %v423
        %v440 = vmul.f32 %v392, %v424
        %v441 = vmul.f32 %v393, %v425
        %v442 = vmul.f32 %v394, %v426
        %v443 = vmul.f32 %v395, %v427
        %v444 = vmul.f32 %v396, %v428
        %v445 = vmul.f32 %v397, %v429
        %v446 = vadd.f32 %v430, -0.16666655
        %v447 = vadd.f32 %v431, -0.16666655
        %v448 = vadd.f32 %v432, -0.16666655
        %v449 = vadd.f32 %v433, -0.16666655
        %v450 = vadd.f32 %v434, -0.16666655
        %v451 = vadd.f32 %v435, -0.16666655
        %v452 = vadd.f32 %v436, -0.16666655
        %v453 = vadd.f32 %v437, -0.16666655
        %v454 = vadd.f32 %v438, -0.16666655
        %v455 = vadd.f32 %v439, -0.16666655
        %v456 = vadd.f32 %v440, -0.16666655
        %v457 = vadd.f32 %v441, -0.16666655
        %v458 = vadd.f32 %v442, -0.16666655
        %v459 = vadd.f32 %v443, -0.16666655
        %v460 = vadd.f32 %v444, -0.16666655
        %v461 = vadd.f32 %v445, -0.16666655
        %v462 = vmul.f32 %v382, %v446
        %v463 = vmul.f32 %v383, %v447
        %v464 = vmul.f32 %v384, %v448
        %v465 = vmul.f32 %v385, %v449
        %v466 = vmul.f32 %v386, %v450
        %v467 = vmul.f32 %v387, %v451
        %v468 = vmul.f32 %v388, %v452
        %v469 = vmul.f32 %v389, %v453
        %v470 = vmul.f32 %v390, %v454
        %v471 = vmul.f32 %v391, %v455
        %v472 = vmul.f32 %v392, %v456
        %v473 = vmul.f32 %v393, %v457
        %v474 = vmul.f32 %v394, %v458
        %v475 = vmul.f32 %v395, %v459
        %v476 = vmul.f32 %v396, %v460
        %v477 = vmul.f32 %v397, %v461
        %v478 = vadd.f32 %v462, 1.0
        %v479 = vadd.f32 %v463, 1.0
        %v480 = vadd.f32 %v464, 1.0
        %v481 = vadd.f32 %v465, 1.0
        %v482 = vadd.f32 %v466, 1.0
        %v483 = vadd.f32 %v467, 1.0
        %v484 = vadd.f32 %v468, 1.0
        %v485 = vadd.f32 %v469, 1.0
        %v486 = vadd.f32 %v470, 1.0
        %v487 = vadd.f32 %v471, 1.0
        %v488 = vadd.f32 %v472, 1.0
        %v489 = vadd.f32 %v473, 1.0
        %v490 = vadd.f32 %v474, 1.0
        %v491 = vadd.f32 %v475, 1.0
        %v492 = vadd.f32 %v476, 1.0
        %v493 = vadd.f32 %v477, 1.0
        %v494 = vmul.f32 %v366, %v478
        %v495 = vmul.f32 %v367, %v479
        %v496 = vmul.f32 %v368, %v480
        %v497 = vmul.f32 %v369, %v481
        %v498 = vmul.f32 %v370, %v482
        %v499 = vmul.f32 %v371, %v483
        %v500 = vmul.f32 %v372, %v484
        %v501 = vmul.f32 %v373, %v485
        %v502 = vmul.f32 %v374, %v486
        %v503 = vmul.f32 %v375, %v487
        %v504 = vmul.f32 %v376, %v488
        %v505 = vmul.f32 %v377, %v489
        %v506 = vmul.f32 %v378, %v490
        %v507 = vmul.f32 %v379, %v491
        %v508 = vmul.f32 %v380, %v492
        %v509 = vmul.f32 %v381, %v493
        %v510 = vmul.f32 %v382, 2.4433157e-05
        %v511 = vmul.f32 %v383, 2.4433157e-05
        %v512 = vmul.f32 %v384, 2.4433157e-05
        %v513 = vmul.f32 %v385, 2.4433157e-05
        %v514 = vmul.f32 %v386, 2.4433157e-05
        %v515 = vmul.f32 %v387, 2.4433157e-05
        %v516 = vmul.f32 %v388, 2.4433157e-05
        %v517 = vmul.f32 %v389, 2.4433157e-05
        %v518 = vmul.f32 %v390, 2.4433157e-05
        %v519 = vmul.f32 %v391, 2.4433157e-05
        %v520 = vmul.f32 %v392, 2.4433157e-05
        %v521 = vmul.f32 %v393, 2.4433157e-05
        %v522 = vmul.f32 %v394, 2.4433157e-05
        %v523 = vmul.f32 %v395, 2.4433157e-05
        %v524 = vmul.f32 %v396, 2.4433157e-05
        %v525 = vmul.f32 %v397, 2.4433157e-05
        %v526 = vadd.f32 %v510, -0.0013887316
        %v527 = vadd.f32 %v511, -0.0013887316
        %v528 = vadd.f32 %v512, -0.0013887316
        %v529 = vadd.f32 %v513, -0.0013887316
        %v530 = vadd.f32 %v514, -0.0013887316
        %v531 = vadd.f32 %v515, -0.0013887316
        %v532 = vadd.f32 %v516, -0.0013887316
        %v533 = vadd.f32 %v517, -0.0013887316
        %v534 = vadd.f32 %v518, -0.0013887316
        %v535 = vadd.f32 %v519, -0.0013887316
        %v536 = vadd.f32 %v520, -0.0013887316
        %v537 = vadd.f32 %v521, -0.0013887316
        %v538 = vadd.f32 %v522, -0.0013887316
        %v539 = vadd.f32 %v523, -0.0013887316
        %v540 = vadd.f32 %v524, -0.0013887316
        %v541 = vadd.f32 %v525, -0.0013887316
        %v542 = vmul.f32 %v382, %v526
        %v543 = vmul.f32 %v383, %v527
        %v544 = vmul.f32 %v384, %v528
        %v545 = vmul.f32 %v385, %v529
        %v546 = vmul.f32 %v386, %v530
        %v547 = vmul.f32 %v387, %v531
        %v548 = vmul.f32 %v388, %v532
        %v549 = vmul.f32 %v389, %v533
        %v550 = vmul.f32 %v390, %v534
        %v551 = vmul.f32 %v391, %v535
        %v552 = vmul.f32 %v392, %v536
        %v553 = vmul.f32 %v393, %v537
        %v554 = vmul.f32 %v394, %v538
        %v555 = vmul.f32 %v395, %v539
        %v556 = vmul.f32 %v396, %v540
        %v557 = vmul.f32 %v397, %v541
        %v558 = vadd.f32 %v542, 0.041666646
        %v559 = vadd.f32 %v543, 0.041666646
        %v560 = vadd.f32 %v544, 0.041666646
        %v561 = vadd.f32 %v545, 0.041666646
        %v562 = vadd.f32 %v546, 0.041666646
        %v563 = vadd.f32 %v547, 0.041666646
        %v564 = vadd.f32 %v548, 0.041666646
        %v565 = vadd.f32 %v549, 0.041666646
        %v566 = vadd.f32 %v550, 0.041666646
        %v567 = vadd.f32 %v551, 0.041666646
        %v568 = vadd.f32 %v552, 0.041666646
        %v569 = vadd.f32 %v553, 0.041666646
        %v570 = vadd.f32 %v554, 0.041666646
        %v571 = vadd.f32 %v555, 0.041666646
        %v572 = vadd.f32 %v556, 0.041666646
        %v573 = vadd.f32 %v557, 0.041666646
        %v574 = vmul.f32 %v382, %v558
        %v575 = vmul.f32 %v383, %v559
        %v576 = vmul.f32 %v384, %v560
        %v577 = vmul.f32 %v385, %v561
        %v578 = vmul.f32 %v386, %v562
        %v579 = vmul.f32 %v387, %v563
        %v580 = vmul.f32 %v388, %v564
        %v581 = vmul.f32 %v389, %v565
        %v582 = vmul.f32 %v390, %v566
        %v583 = vmul.f32 %v391, %v567
        %v584 = vmul.f32 %v392, %v568
        %v585 = vmul.f32 %v393, %v569
        %v586 = vmul.f32 %v394, %v570
        %v587 = vmul.f32 %v395, %v571
        %v588 = vmul.f32 %v396, %v572
        %v589 = vmul.f32 %v397, %v573
        %v590 = vadd.f32 %v574, -0.5
        %v591 = vadd.f32 %v575, -0.5
        %v592 = vadd.f32 %v576, -0.5
        %v593 = vadd.f32 %v577, -0.5
        %v594 = vadd.f32 %v578, -0.5
        %v595 = vadd.f32 %v579, -0.5
        %v596 = vadd.f32 %v580, -0.5
        %v597 = vadd.f32 %v581, -0.5
        %v598 = vadd.f32 %v582, -0.5
        %v599 = vadd.f32 %v583, -0.5
        %v600 = vadd.f32 %v584, -0.5
        %v601 = vadd.f32 %v585, -0.5
        %v602 = vadd.f32 %v586, -0.5
        %v603 = vadd.f32 %v587, -0.5
        %v604 = vadd.f32 %v588, -0.5
        %v605 = vadd.f32 %v589, -0.5
        %v606 = vmul.f32 %v382, %v590
        %v607 = vmul.f32 %v383, %v591
        %v608 = vmul.f32 %v384, %v592
        %v609 = vmul.f32 %v385, %v593
        %v610 = vmul.f32 %v386, %v594
        %v611 = vmul.f32 %v387, %v595
        %v612 = vmul.f32 %v388, %v596
        %v613 = vmul.f32 %v389, %v597
        %v614 = vmul.f32 %v390, %v598
        %v615 = vmul.f32 %v391, %v599
        %v616 = vmul.f32 %v392, %v600
        %v617 = vmul.f32 %v393, %v601
        %v618 = vmul.f32 %v394, %v602
        %v619 = vmul.f32 %v395, %v603
        %v620 = vmul.f32 %v396, %v604
        %v621 = vmul.f32 %v397, %v605
        %v622 = vadd.f32 %v606, 1.0
        %v623 = vadd.f32 %v607, 1.0
        %v624 = vadd.f32 %v608, 1.0
        %v625 = vadd.f32 %v609, 1.0
        %v626 = vadd.f32 %v610, 1.0
        %v627 = vadd.f32 %v611, 1.0
        %v628 = vadd.f32 %v612, 1.0
        %v629 = vadd.f32 %v613, 1.0
        %v630 = vadd.f32 %v614, 1.0
        %v631 = vadd.f32 %v615, 1.0
        %v632 = vadd.f32 %v616, 1.0
        %v633 = vadd.f32 %v617, 1.0
        %v634 = vadd.f32 %v618, 1.0
        %v635 = vadd.f32 %v619, 1.0
        %v636 = vadd.f32 %v620, 1.0
        %v637 = vadd.f32 %v621, 1.0
        %v638 = vcvt.f32.s32.ties.to.even %v302
        %v639 = vcvt.f32.s32.ties.to.even %v303
        %v640 = vcvt.f32.s32.ties.to.even %v304
        %v641 = vcvt.f32.s32.ties.to.even %v305
        %v642 = vcvt.f32.s32.ties.to.even %v306
        %v643 = vcvt.f32.s32.ties.to.even %v307
        %v644 = vcvt.f32.s32.ties.to.even %v308
        %v645 = vcvt.f32.s32.ties.to.even %v309
        %v646 = vcvt.f32.s32.ties.to.even %v310
        %v647 = vcvt.f32.s32.ties.to.even %v311
        %v648 = vcvt.f32.s32.ties.to.even %v312
        %v649 = vcvt.f32.s32.ties.to.even %v313
        %v650 = vcvt.f32.s32.ties.to.even %v314
        %v651 = vcvt.f32.s32.ties.to.even %v315
        %v652 = vcvt.f32.s32.ties.to.even %v316
        %v653 = vcvt.f32.s32.ties.to.even %v317
        %v654 = vadd.s32 %v638, 4
        %v655 = vadd.s32 %v639, 4
        %v656 = vadd.s32 %v640, 4
        %v657 = vadd.s32 %v641, 4
        %v658 = vadd.s32 %v642, 4
        %v659 = vadd.s32 %v643, 4
        %v660 = vadd.s32 %v644, 4
        %v661 = vadd.s32 %v645, 4
        %v662 = vadd.s32 %v646, 4
        %v663 = vadd.s32 %v647, 4
        %v664 = vadd.s32 %v648, 4
        %v665 = vadd.s32 %v649, 4
        %v666 = vadd.s32 %v650, 4
        %v667 = vadd.s32 %v651, 4
        %v668 = vadd.s32 %v652, 4
        %v669 = vadd.s32 %v653, 4
        %v670 = vand.u32 %v654, 3
        %v671 = vand.u32 %v655, 3
        %v672 = vand.u32 %v656, 3
        %v673 = vand.u32 %v657, 3
        %v674 = vand.u32 %v658, 3
        %v675 = vand.u32 %v659, 3
        %v676 = vand.u32 %v660, 3
        %v677 = vand.u32 %v661, 3
        %v678 = vand.u32 %v662, 3
        %v679 = vand.u32 %v663, 3
        %v680 = vand.u32 %v664, 3
        %v681 = vand.u32 %v665, 3
        %v682 = vand.u32 %v666, 3
        %v683 = vand.u32 %v667, 3
        %v684 = vand.u32 %v668, 3
        %v685 = vand.u32 %v669, 3
        %vm686 = vcmp.eq.s32.totalorder %v670, 1
        %vm687 = vcmp.eq.s32.totalorder %v671, 1
        %vm688 = vcmp.eq.s32.totalorder %v672, 1
        %vm689 = vcmp.eq.s32.totalorder %v673, 1
        %vm690 = vcmp.eq.s32.totalorder %v674, 1
        %vm691 = vcmp.eq.s32.totalorder %v675, 1
        %vm692 = vcmp.eq.s32.totalorder %v676, 1
        %vm693 = vcmp.eq.s32.totalorder %v677, 1
        %vm694 = vcmp.eq.s32.totalorder %v678, 1
        %vm695 = vcmp.eq.s32.totalorder %v679, 1
        %vm696 = vcmp.eq.s32.totalorder %v680, 1
        %vm697 = vcmp.eq.s32.totalorder %v681, 1
        %vm698 = vcmp.eq.s32.totalorder %v682, 1
        %vm699 = vcmp.eq.s32.totalorder %v683, 1
        %vm700 = vcmp.eq.s32.totalorder %v684, 1
        %vm701 = vcmp.eq.s32.totalorder %v685, 1
        %vm702 = vcmp.eq.s32.totalorder %v670, 3
        %vm703 = vcmp.eq.s32.totalorder %v671, 3
        %vm704 = vcmp.eq.s32.totalorder %v672, 3
        %vm705 = vcmp.eq.s32.totalorder %v673, 3
        %vm706 = vcmp.eq.s32.totalorder %v674, 3
        %vm707 = vcmp.eq.s32.totalorder %v675, 3
        %vm708 = vcmp.eq.s32.totalorder %v676, 3
        %vm709 = vcmp.eq.s32.totalorder %v677, 3
        %vm710 = vcmp.eq.s32.totalorder %v678, 3
        %vm711 = vcmp.eq.s32.totalorder %v679, 3
        %vm712 = vcmp.eq.s32.totalorder %v680, 3
        %vm713 = vcmp.eq.s32.totalorder %v681, 3
        %vm714 = vcmp.eq.s32.totalorder %v682, 3
        %vm715 = vcmp.eq.s32.totalorder %v683, 3
        %vm716 = vcmp.eq.s32.totalorder %v684, 3
        %vm717 = vcmp.eq.s32.totalorder %v685, 3
        %vm718 = vmor %vm686, %vm702
        %vm719 = vmor %vm687, %vm703
        %vm720 = vmor %vm688, %vm704
        %vm721 = vmor %vm689, %vm705
        %vm722 = vmor %vm690, %vm706
        %vm723 = vmor %vm691, %vm707
        %vm724 = vmor %vm692, %vm708
        %vm725 = vmor %vm693, %vm709
        %vm726 = vmor %vm694, %vm710
        %vm727 = vmor %vm695, %vm711
        %vm728 = vmor %vm696, %vm712
        %vm729 = vmor %vm697, %vm713
        %vm730 = vmor %vm698, %vm714
        %vm731 = vmor %vm699, %vm715
        %vm732 = vmor %vm700, %vm716
        %vm733 = vmor %vm701, %vm717
        %v734 = vsel %vm718, %v622, %v494
        %v735 = vsel %vm719, %v623, %v495
        %v736 = vsel %vm720, %v624, %v496
        %v737 = vsel %vm721, %v625, %v497
        %v738 = vsel %vm722, %v626, %v498
        %v739 = vsel %vm723, %v627, %v499
        %v740 = vsel %vm724, %v628, %v500
        %v741 = vsel %vm725, %v629, %v501
        %v742 = vsel %vm726, %v630, %v502
        %v743 = vsel %vm727, %v631, %v503
        %v744 = vsel %vm728, %v632, %v504
        %v745 = vsel %vm729, %v633, %v505
        %v746 = vsel %vm730, %v634, %v506
        %v747 = vsel %vm731, %v635, %v507
        %v748 = vsel %vm732, %v636, %v508
        %v749 = vsel %vm733, %v637, %v509
        %v750 = vsel %vm718, %v494, %v622
        %v751 = vsel %vm719, %v495, %v623
        %v752 = vsel %vm720, %v496, %v624
        %v753 = vsel %vm721, %v497, %v625
        %v754 = vsel %vm722, %v498, %v626
        %v755 = vsel %vm723, %v499, %v627
        %v756 = vsel %vm724, %v500, %v628
        %v757 = vsel %vm725, %v501, %v629
        %v758 = vsel %vm726, %v502, %v630
        %v759 = vsel %vm727, %v503, %v631
        %v760 = vsel %vm728, %v504, %v632
        %v761 = vsel %vm729, %v505, %v633
        %v762 = vsel %vm730, %v506, %v634
        %v763 = vsel %vm731, %v507, %v635
        %v764 = vsel %vm732, %v508, %v636
        %v765 = vsel %vm733, %v509, %v637
        %vm766 = vcmp.eq.s32.totalorder %v670, 2
        %vm767 = vcmp.eq.s32.totalorder %v671, 2
        %vm768 = vcmp.eq.s32.totalorder %v672, 2
        %vm769 = vcmp.eq.s32.totalorder %v673, 2
        %vm770 = vcmp.eq.s32.totalorder %v674, 2
        %vm771 = vcmp.eq.s32.totalorder %v675, 2
        %vm772 = vcmp.eq.s32.totalorder %v676, 2
        %vm773 = vcmp.eq.s32.totalorder %v677, 2
        %vm774 = vcmp.eq.s32.totalorder %v678, 2
        %vm775 = vcmp.eq.s32.totalorder %v679, 2
        %vm776 = vcmp.eq.s32.totalorder %v680, 2
        %vm777 = vcmp.eq.s32.totalorder %v681, 2
        %vm778 = vcmp.eq.s32.totalorder %v682, 2
        %vm779 = vcmp.eq.s32.totalorder %v683, 2
        %vm780 = vcmp.eq.s32.totalorder %v684, 2
        %vm781 = vcmp.eq.s32.totalorder %v685, 2
        %vm782 = vmor %vm766, %vm702
        %vm783 = vmor %vm767, %vm703
        %vm784 = vmor %vm768, %vm704
        %vm785 = vmor %vm769, %vm705
        %vm786 = vmor %vm770, %vm706
        %vm787 = vmor %vm771, %vm707
        %vm788 = vmor %vm772, %vm708
        %vm789 = vmor %vm773, %vm709
        %vm790 = vmor %vm774, %vm710
        %vm791 = vmor %vm775, %vm711
        %vm792 = vmor %vm776, %vm712
        %vm793 = vmor %vm777, %vm713
        %vm794 = vmor %vm778, %vm714
        %vm795 = vmor %vm779, %vm715
        %vm796 = vmor %vm780, %vm716
        %vm797 = vmor %vm781, %vm717
        %v798 = vsub.f32 0.0, %v734
        %v799 = vsub.f32 0.0, %v735
        %v800 = vsub.f32 0.0, %v736
        %v801 = vsub.f32 0.0, %v737
        %v802 = vsub.f32 0.0, %v738
        %v803 = vsub.f32 0.0, %v739
        %v804 = vsub.f32 0.0, %v740
        %v805 = vsub.f32 0.0, %v741
        %v806 = vsub.f32 0.0, %v742
        %v807 = vsub.f32 0.0, %v743
        %v808 = vsub.f32 0.0, %v744
        %v809 = vsub.f32 0.0, %v745
        %v810 = vsub.f32 0.0, %v746
        %v811 = vsub.f32 0.0, %v747
        %v812 = vsub.f32 0.0, %v748
        %v813 = vsub.f32 0.0, %v749
        %v814 = vsel %vm782, %v798, %v734
        %v815 = vsel %vm783, %v799, %v735
        %v816 = vsel %vm784, %v800, %v736
        %v817 = vsel %vm785, %v801, %v737
        %v818 = vsel %vm786, %v802, %v738
        %v819 = vsel %vm787, %v803, %v739
        %v820 = vsel %vm788, %v804, %v740
        %v821 = vsel %vm789, %v805, %v741
        %v822 = vsel %vm790, %v806, %v742
        %v823 = vsel %vm791, %v807, %v743
        %v824 = vsel %vm792, %v808, %v744
        %v825 = vsel %vm793, %v809, %v745
        %v826 = vsel %vm794, %v810, %v746
        %v827 = vsel %vm795, %v811, %v747
        %v828 = vsel %vm796, %v812, %v748
        %v829 = vsel %vm797, %v813, %v749
        %vm830 = vmor %vm686, %vm766
        %vm831 = vmor %vm687, %vm767
        %vm832 = vmor %vm688, %vm768
        %vm833 = vmor %vm689, %vm769
        %vm834 = vmor %vm690, %vm770
        %vm835 = vmor %vm691, %vm771
        %vm836 = vmor %vm692, %vm772
        %vm837 = vmor %vm693, %vm773
        %vm838 = vmor %vm694, %vm774
        %vm839 = vmor %vm695, %vm775
        %vm840 = vmor %vm696, %vm776
        %vm841 = vmor %vm697, %vm777
        %vm842 = vmor %vm698, %vm778
        %vm843 = vmor %vm699, %vm779
        %vm844 = vmor %vm700, %vm780
        %vm845 = vmor %vm701, %vm781
        %v846 = vsub.f32 0.0, %v750
        %v847 = vsub.f32 0.0, %v751
        %v848 = vsub.f32 0.0, %v752
        %v849 = vsub.f32 0.0, %v753
        %v850 = vsub.f32 0.0, %v754
        %v851 = vsub.f32 0.0, %v755
        %v852 = vsub.f32 0.0, %v756
        %v853 = vsub.f32 0.0, %v757
        %v854 = vsub.f32 0.0, %v758
        %v855 = vsub.f32 0.0, %v759
        %v856 = vsub.f32 0.0, %v760
        %v857 = vsub.f32 0.0, %v761
        %v858 = vsub.f32 0.0, %v762
        %v859 = vsub.f32 0.0, %v763
        %v860 = vsub.f32 0.0, %v764
        %v861 = vsub.f32 0.0, %v765
        %v862 = vsel %vm830, %v846, %v750
        %v863 = vsel %vm831, %v847, %v751
        %v864 = vsel %vm832, %v848, %v752
        %v865 = vsel %vm833, %v849, %v753
        %v866 = vsel %vm834, %v850, %v754
        %v867 = vsel %vm835, %v851, %v755
        %v868 = vsel %vm836, %v852, %v756
        %v869 = vsel %vm837, %v853, %v757
        %v870 = vsel %vm838, %v854, %v758
        %v871 = vsel %vm839, %v855, %v759
        %v872 = vsel %vm840, %v856, %v760
        %v873 = vsel %vm841, %v857, %v761
        %v874 = vsel %vm842, %v858, %v762
        %v875 = vsel %vm843, %v859, %v763
        %v876 = vsel %vm844, %v860, %v764
        %v877 = vsel %vm845, %v861, %v765
        %878 = vst [vmem:[%s137] sm:$0xff] %v814
        %879 = vst [vmem:[%s137 + $0x8] sm:$0xff] %v815
        %880 = vst [vmem:[%s137 + $0x20] sm:$0xff] %v816
        %881 = vst [vmem:[%s137 + $0x28] sm:$0xff] %v817
        %882 = vst [vmem:[%s137 + $0x40] sm:$0xff] %v818
        %883 = vst [vmem:[%s137 + $0x48] sm:$0xff] %v819
        %884 = vst [vmem:[%s137 + $0x60] sm:$0xff] %v820
        %885 = vst [vmem:[%s137 + $0x68] sm:$0xff] %v821
        %886 = vst [vmem:[%s137 + $0x80] sm:$0xff] %v822
        %887 = vst [vmem:[%s137 + $0x88] sm:$0xff] %v823
        %888 = vst [vmem:[%s137 + $0xa0] sm:$0xff] %v824
        %889 = vst [vmem:[%s137 + $0xa8] sm:$0xff] %v825
        %890 = vst [vmem:[%s137 + $0xc0] sm:$0xff] %v826
        %891 = vst [vmem:[%s137 + $0xc8] sm:$0xff] %v827
        %892 = vst [vmem:[%s137 + $0xe0] sm:$0xff] %v828
        %893 = vst [vmem:[%s137 + $0xe8] sm:$0xff] %v829
        %894 = vst [vmem:[%s137 + $0x10] sm:$0xff] %v862
        %895 = vst [vmem:[%s137 + $0x18] sm:$0xff] %v863
        %896 = vst [vmem:[%s137 + $0x30] sm:$0xff] %v864
        %897 = vst [vmem:[%s137 + $0x38] sm:$0xff] %v865
        %898 = vst [vmem:[%s137 + $0x50] sm:$0xff] %v866
        %899 = vst [vmem:[%s137 + $0x58] sm:$0xff] %v867
        %900 = vst [vmem:[%s137 + $0x70] sm:$0xff] %v868
        %901 = vst [vmem:[%s137 + $0x78] sm:$0xff] %v869
        %902 = vst [vmem:[%s137 + $0x90] sm:$0xff] %v870
        %903 = vst [vmem:[%s137 + $0x98] sm:$0xff] %v871
        %904 = vst [vmem:[%s137 + $0xb0] sm:$0xff] %v872
        %905 = vst [vmem:[%s137 + $0xb8] sm:$0xff] %v873
        %906 = vst [vmem:[%s137 + $0xd0] sm:$0xff] %v874
        %907 = vst [vmem:[%s137 + $0xd8] sm:$0xff] %v875
        %908 = vst [vmem:[%s137 + $0xf0] sm:$0xff] %v876
        %909 = vst [vmem:[%s137 + $0xf8] sm:$0xff] %v877
        %s910 = sand.u32 %s71, 1
        %s911 = scalar_lea.sflag [#allocation3], %s910
        %s912 = sand.u32 %s71, 1
        %s913 = smul.addr %s912, 256
        %s914 = scalar_lea.vmem [#allocation2], %s913
        // Predicated region
        $region29: #{tpu_custom_call.1} parent=27 // pred_check
          %p915 = pneg %p81
        $region30: #{tpu_custom_call.1} parent=27 // pred_check_branch
          %917 = sbr.rel (%p915) target = $region32
        $region31: #{tpu_custom_call.1} parent=27 // pred_region
          %s918 = smul.u32 8, %s16
          %920 = vsyncadd %s911, 0
          %s921 = smul.addr %s918, 4
          %s922 = smul.addr %s921, 8
          %s923 = scalar_lea.hbm %s2, %s922
          %s924 = sshll.u32 %s914, 4
          %s925 = int_to_ptr.vmem [resolvable:$true] %s924
          %s926 = sshll.u32 %s923, 4
          %s927 = int_to_ptr.hbm [resolvable:$true] %s926
          %932 = dma.vmem_to_hbm [thread:$0]  %s925, 4096, %s927, %s911, 512, 512, 32
        $region32: #{tpu_custom_call.1} parent=27 // pred_fallthru
          _
      $region28: #{tpu_custom_call.1} parent=5 // pred_fallthru
        _
      %p933 = scmp.le.s32.totalorder 2, %s11
      // Predicated region
      $region33: #{tpu_custom_call.1} parent=5 // pred_check
        %p934 = pneg %p933
      $region34: #{tpu_custom_call.1} parent=5 // pred_check_branch
        %936 = sbr.rel (%p934) target = $region36
      $region35: #{tpu_custom_call.1} parent=5 // pred_region
        %s937 = ssub.s32 %s11, 2
        // Predicated region
        $region37: #{tpu_custom_call.1} parent=35 // pred_check
          %p938 = pneg %p87
        $region38: #{tpu_custom_call.1} parent=35 // pred_check_branch
          %940 = sbr.rel (%p938) target = $region40
        $region39: #{tpu_custom_call.1} parent=35 // pred_region
          %s941 = sand.u32 %s72, 1
          %s942 = scalar_lea.sflag [#allocation3], %s941
          %s943 = sand.u32 %s72, 1
          %s944 = smul.addr %s943, 256
          %s945 = scalar_lea.vmem [#allocation2], %s944
          %947 = dma.done %s942, 4096
        $region40: #{tpu_custom_call.1} parent=35 // pred_fallthru
          _
      $region36: #{tpu_custom_call.1} parent=5 // pred_fallthru
        _
    $region6: #{tpu_custom_call.1} parent=1 // loop_footer
      %s15 = sadd.s32 1, %s11
    $region7: #{tpu_custom_call.1} parent=1 // loop_footer_branch
      %10 = sbr.rel target = $region3
    $region8: #{tpu_custom_call.1} parent=1 // loop_exit
      _
    %948 = vsyncpa [#allocation3], 1
    %s949 = scalar_lea.sflag [#allocation3], 1
    %950 = vsyncpa %s949, 1

</llo_original>
